<compile_context>
chip_gen: v5e
topology: v5e:2x2
jax: 0.10.0
libtpu: 0.0.40
codegen_flags: <defaults>
</compile_context>

<pallas_src>
import jax
import jax.numpy as jnp
from jax.experimental import pallas as pl
from jax.experimental.pallas import tpu as pltpu

LANE = 128


def _round_up(v, m):
    return ((v + m - 1) // m) * m


def _tpu_vmem_bytes():
    """Physical per-core VMEM; conservative fallback (v7x) if query fails."""
    try:
        cap = getattr(pltpu.get_tpu_info(), "vmem_capacity_bytes", None)
        if cap:
            return int(cap)
    except Exception:
        pass
    return 64 * 1024 * 1024


def _sanitize_tile(t, hw):
    """Round a user-provided HW tile up to a multiple of 128 and clamp to HW."""
    if hw < LANE:
        return hw
    return min(_round_up(hw, LANE), max(LANE, _round_up(int(t), LANE)))


def _pick_pool_tile(hw, c_in, itemsize, budget):
    """Lane-dense pool tile: ~16 MiB per fetched block, double-buffer in budget."""
    if hw < LANE:
        return hw
    hw128 = _round_up(hw, LANE)
    per_lane = max(1, c_in * itemsize)
    fit = ((budget * 3 // 5) // (2 * per_lane)) // LANE * LANE   # 2 input buffers
    target = ((16 << 20) // per_lane) // LANE * LANE
    return min(hw128, max(LANE, min(fit, target)))


def _pick_bcast_tile(hw, c_out, itemsize, budget):
    """Lane-dense broadcast tile: ~8 MiB per written block, double-buffered."""
    if hw < LANE:
        return hw
    hw128 = _round_up(hw, LANE)
    per_lane = max(1, c_out * itemsize)
    fit = ((budget // 2) // (2 * per_lane)) // LANE * LANE       # 2 output buffers
    target = ((8 << 20) // per_lane) // LANE * LANE
    return min(hw128, max(LANE, min(fit, target)))


def _pick_split(n, kt):
    """2-way HW split for the v7x core-parallel axis when batch can't fill 2 TCs."""
    if n >= 2 or kt < 4 or kt % 2 != 0:
        return 1
    return 2


def _make_pool_kernel(hw, hw_tile, kt_total):
    acc_w = hw_tile if hw_tile < LANE else LANE
    n_slices = hw_tile // acc_w
    ragged = (hw % hw_tile) != 0
    tail_off = (kt_total - 1) * hw_tile

    def _accumulate(acc_ref, x):
        # aligned lane-slices, cast to f32, pairwise (tree) reduce for VPU ILP
        parts = [x[:, s * acc_w:(s + 1) * acc_w].astype(jnp.float32)
                 for s in range(n_slices)]
        while len(parts) > 1:
            nxt = [parts[a] + parts[a + 1] for a in range(0, len(parts) - 1, 2)]
            if len(parts) % 2:
                nxt.append(parts[-1])
            parts = nxt
        acc_ref[...] += parts[0]

    def kernel(x_ref, o_ref, acc_ref):
        # x_ref: (1, C_in, hw_tile)   o_ref: (1, 1, C_in, 1)   acc_ref: (C_in, acc_w) f32
        p = pl.program_id(1)
        k = pl.program_id(2)

        @pl.when(k == 0)
        def _init():
            acc_ref[...] = jnp.zeros_like(acc_ref)

        if ragged:
            # mask only on the very last global HW tile; steady state is unmasked
            is_tail = jnp.logical_and(p == pl.num_programs(1) - 1,
                                      k == pl.num_programs(2) - 1)

            @pl.when(jnp.logical_not(is_tail))
            def _steady():
                _accumulate(acc_ref, x_ref[0])

            @pl.when(is_tail)
            def _masked_tail():
                x = x_ref[0]
                col = jax.lax.broadcasted_iota(jnp.int32, x.shape, 1) + tail_off
                _accumulate(acc_ref, jnp.where(col < hw, x, jnp.zeros_like(x)))
        else:
            _accumulate(acc_ref, x_ref[0])

        @pl.when(k == pl.num_programs(2) - 1)
        def _finalize():
            o_ref[...] = jnp.sum(acc_ref[...], axis=-1,
                                 keepdims=True)[None, None].astype(o_ref.dtype)

    return kernel


def _broadcast_kernel(y_ref, o_ref):
    # y_ref: (1, C_out, 1) f32   o_ref: (1, C_out, t2)  -- lane-dense constant store
    o_ref[...] = jnp.broadcast_to(y_ref[...].astype(o_ref.dtype), o_ref.shape)


def aspp_pooling(x, weight, *, pool_hw_tile=None, bcast_hw_tile=None, materialize=True):
    """x: (N, C_in, H, W); weight: (C_out, C_in, 1, 1) -> (N, C_out, H, W)."""
    n, c_in, h, w = x.shape
    c_out = weight.shape[0]
    hw = h * w
    x_flat = x.reshape(n, c_in, hw)

    vmem_cap = _tpu_vmem_bytes()
    budget = vmem_cap // 2            # budget for pipelined buffers
    vmem_limit = vmem_cap * 3 // 4    # scoped VMEM handed to Mosaic (headroom kept)

    # ---- phase 1: tiled global average pool -> per-split partial sums ----
    t1 = (_sanitize_tile(pool_hw_tile, hw) if pool_hw_tile is not None
          else _pick_pool_tile(hw, c_in, x.dtype.itemsize, budget))
    kt = pl.cdiv(hw, t1)
    split = _pick_split(n, kt)
    kt_part = kt // split
    acc_w = t1 if t1 < LANE else LANE

    pooled_parts = pl.pallas_call(
        _make_pool_kernel(hw, t1, kt),
        out_shape=jax.ShapeDtypeStruct((n, split, c_in, 1), jnp.float32),
        grid_spec=pltpu.PrefetchScalarGridSpec(
            num_scalar_prefetch=0,
            grid=(n, split, kt_part),
            in_specs=[pl.BlockSpec((1, c_in, t1),
                                   lambda i, p, k: (i, 0, p * kt_part + k))],
            out_specs=pl.BlockSpec((1, 1, c_in, 1), lambda i, p, k: (i, p, 0, 0)),
            scratch_shapes=[pltpu.VMEM((c_in, acc_w), jnp.float32)],
        ),
        compiler_params=pltpu.CompilerParams(
            dimension_semantics=("parallel", "parallel", "arbitrary"),
            vmem_limit_bytes=vmem_limit,
        ),
    )(x_flat)

    # ---- 1x1 conv (no bias) + ReLU on pooled means: tiny, hoisted to XLA ----
    pooled = pooled_parts.sum(axis=1)[..., 0] * jnp.float32(1.0 / hw)     # (N, C_in)
    w2d = weight.reshape(c_out, c_in).astype(jnp.float32)
    y = jnp.maximum(jnp.dot(pooled, w2d.T,
                            precision=jax.lax.Precision.HIGHEST), 0.0)    # (N, C_out)

    if not materialize:
        return y.reshape(n, c_out, 1, 1).astype(x.dtype)

    # ---- phase 2: broadcast back to HxW (bilinear upsample of 1x1 == constant) ----
    t2 = (_sanitize_tile(bcast_hw_tile, hw) if bcast_hw_tile is not None
          else _pick_bcast_tile(hw, c_out, x.dtype.itemsize, budget))
    jt = pl.cdiv(hw, t2)
    out_flat = pl.pallas_call(
        _broadcast_kernel,
        out_shape=jax.ShapeDtypeStruct((n, c_out, hw), x.dtype),
        grid=(n, jt),
        in_specs=[pl.BlockSpec((1, c_out, 1), lambda i, j: (i, 0, 0))],
        out_specs=pl.BlockSpec((1, c_out, t2), lambda i, j: (i, 0, j)),
        compiler_params=pltpu.CompilerParams(
            dimension_semantics=("parallel", "parallel"),
            vmem_limit_bytes=vmem_limit,
        ),
    )(y.reshape(n, c_out, 1))
    return out_flat.reshape(n, c_out, h, w)


def _reference(x, weight):
    """Pure-JAX reference mirroring the PyTorch module semantics."""
    pooled = jnp.mean(x.astype(jnp.float32), axis=(2, 3))                       # (N, C_in)
    w2d = weight.reshape(weight.shape[0], weight.shape[1]).astype(jnp.float32)
    y = jnp.maximum(jnp.dot(pooled, w2d.T,
                            precision=jax.lax.Precision.HIGHEST), 0.0)
    return jnp.broadcast_to(
        y[:, :, None, None],
        (x.shape[0], weight.shape[0], x.shape[2], x.shape[3])).astype(x.dtype)


if __name__ == "__main__":
    root = jax.random.PRNGKey(0)

    def run_case(seed, n, c_in, c_out, h, w, **kw):
        kx, kw_ = jax.random.split(jax.random.fold_in(root, seed))
        x = jax.random.normal(kx, (n, c_in, h, w), dtype=jnp.float32)
        weight = jax.random.normal(kw_, (c_out, c_in, 1, 1), dtype=jnp.float32) * 0.1
        out = aspp_pooling(x, weight, **kw)
        jax.block_until_ready(out)
        ref = _reference(x, weight)
        assert out.shape == ref.shape, f"case {seed}: shape {out.shape} vs {ref.shape}"
        assert jnp.allclose(out, ref, atol=1e-5, rtol=1e-5), f"case {seed}: mismatch"

    # primary small config matching the module spec
    run_case(0, 2, 4, 8, 16, 16)
    # N=1 path: HW reduction split across the (v7x) core-parallel axis
    run_case(1, 1, 8, 16, 32, 32, pool_hw_tile=256)
    # ragged HW tail: mask only executes on the final tile
    run_case(2, 1, 4, 8, 19, 17, pool_hw_tile=128)

    print("KERNEL_OK")
</pallas_src>

<mosaic_0001>
module attributes {stable_mosaic.version = 11 : i64} {
  func.func @kernel(%arg0: i32, %arg1: i32, %arg2: i32, %arg3: memref<1x4x256xf32, #tpu.memory_space<vmem>>, %arg4: memref<1x1x4x1xf32, #tpu.memory_space<vmem>>, %arg5: memref<4x128xf32, #tpu.memory_space<vmem>>) attributes {dimension_semantics = [#tpu.dimension_semantics<parallel>, #tpu.dimension_semantics<parallel>, #tpu.dimension_semantics<arbitrary>], iteration_bounds = array<i64: 2, 1, 1>, scalar_prefetch = 0 : i64, scratch_operands = 1 : i64, tpu.core_type = #tpu.core_type<tc>, window_params = [{transform_indices = @transform_0, window_bounds = array<i64: 1, 4, 256>}, {transform_indices = @transform_1, window_bounds = array<i64: 1, 1, 4, 1>}]} {
    %c0_i32 = arith.constant 0 : i32
    %0 = arith.cmpi eq, %arg2, %c0_i32 : i32
    %1 = arith.extui %0 : i1 to i32
    %c0_i32_0 = arith.constant 0 : i32
    %2 = arith.cmpi ne, %1, %c0_i32_0 : i32
    scf.if %2 {
      %cst = arith.constant 0.000000e+00 : f32
      %14 = vector.broadcast %cst : f32 to vector<4x128xf32>
      %c0_9 = arith.constant 0 : index
      %c0_10 = arith.constant 0 : index
      %15 = vector.load %arg5[%c0_9, %c0_10] : memref<4x128xf32, #tpu.memory_space<vmem>>, vector<4x128xf32>
      tpu.vector_store %arg5[%c0_9, %c0_10], %14 {strides = array<i32>} : memref<4x128xf32, #tpu.memory_space<vmem>>, vector<4x128xf32>,
    } else {
    }
    %c0 = arith.constant 0 : index
    %c0_1 = arith.constant 0 : index
    %c0_2 = arith.constant 0 : index
    %3 = vector.load %arg3[%c0, %c0_1, %c0_2] : memref<1x4x256xf32, #tpu.memory_space<vmem>>, vector<1x4x256xf32>
    %4 = vector.shape_cast %3 : vector<1x4x256xf32> to vector<4x256xf32>
    %5 = vector.extract_strided_slice %4 {offsets = [0, 0], sizes = [4, 128], strides = [1, 1]} : vector<4x256xf32> to vector<4x128xf32>
    %6 = vector.extract_strided_slice %4 {offsets = [0, 128], sizes = [4, 128], strides = [1, 1]} : vector<4x256xf32> to vector<4x128xf32>
    %7 = arith.addf %5, %6 : vector<4x128xf32>
    %c0_3 = arith.constant 0 : index
    %c0_4 = arith.constant 0 : index
    %8 = vector.load %arg5[%c0_3, %c0_4] : memref<4x128xf32, #tpu.memory_space<vmem>>, vector<4x128xf32>
    %9 = arith.addf %8, %7 : vector<4x128xf32>
    %c0_5 = arith.constant 0 : index
    %c0_6 = arith.constant 0 : index
    %10 = vector.load %arg5[%c0_5, %c0_6] : memref<4x128xf32, #tpu.memory_space<vmem>>, vector<4x128xf32>
    tpu.vector_store %arg5[%c0_5, %c0_6], %9 {strides = array<i32>} : memref<4x128xf32, #tpu.memory_space<vmem>>, vector<4x128xf32>,
    %c0_i32_7 = arith.constant 0 : i32
    %11 = arith.cmpi eq, %arg2, %c0_i32_7 : i32
    %12 = arith.extui %11 : i1 to i32
    %c0_i32_8 = arith.constant 0 : i32
    %13 = arith.cmpi ne, %12, %c0_i32_8 : i32
    scf.if %13 {
      %c0_9 = arith.constant 0 : index
      %c0_10 = arith.constant 0 : index
      %14 = vector.load %arg5[%c0_9, %c0_10] : memref<4x128xf32, #tpu.memory_space<vmem>>, vector<4x128xf32>
      %cst = arith.constant dense<0.000000e+00> : vector<4xf32>
      %15 = vector.multi_reduction <add>, %14, %cst [1] : vector<4x128xf32> to vector<4xf32>
      %16 = vector.shape_cast %15 : vector<4xf32> to vector<4x1xf32>
      %17 = vector.shape_cast %16 : vector<4x1xf32> to vector<1x1x4x1xf32>
      %c0_11 = arith.constant 0 : index
      %c0_12 = arith.constant 0 : index
      %c0_13 = arith.constant 0 : index
      %c0_14 = arith.constant 0 : index
      %18 = vector.load %arg4[%c0_11, %c0_12, %c0_13, %c0_14] : memref<1x1x4x1xf32, #tpu.memory_space<vmem>>, vector<1x1x4x1xf32>
      tpu.vector_store %arg4[%c0_11, %c0_12, %c0_13, %c0_14], %17 {strides = array<i32>} : memref<1x1x4x1xf32, #tpu.memory_space<vmem>>, vector<1x1x4x1xf32>,
    } else {
    }
    return
  }
  func.func @transform_0(%arg0: i32, %arg1: i32, %arg2: i32) -> (i32, i32, i32) {
    %c1_i32 = arith.constant 1 : i32
    %0 = arith.muli %arg1, %c1_i32 : i32
    %1 = arith.addi %0, %arg2 : i32
    %c0_i32 = arith.constant 0 : i32
    %c0_i32_0 = arith.constant 0 : i32
    return %arg0, %c0_i32, %1 : i32, i32, i32
  }
  func.func @transform_1(%arg0: i32, %arg1: i32, %arg2: i32) -> (i32, i32, i32, i32) {
    %c0_i32 = arith.constant 0 : i32
    %c0_i32_0 = arith.constant 0 : i32
    %c0_i32_1 = arith.constant 0 : i32
    return %arg0, %arg1, %c0_i32, %c0_i32_0 : i32, i32, i32, i32
  }
}

</mosaic_0001>

<llo_original>
// kernel: tpu_custom_call.1
$region0: #{tpu_custom_call.1}
  #allocation0 [shape = 'u32[]', space=smem, size = 0x4, offset = 0x4, fixed_abs, tag = 'smem constant byte address 0x4 - core index']
  #allocation1 [shape = 'u32[72,128]{1,0:T(1,128)}', space=vmem, size = 0x9000, scoped, tag = 'internal scratch']
  #allocation2 [shape = 'f32[4,128]{1,0:T(4,128)}', space=vmem, size = 0x800, scoped, tag = 'scratch operand']
  %s0 = inlined_call_operand.hbm [shape: f32[2,4,256], index: 0, kind: input, shape index: {}]
  %s1 = inlined_call_operand.vmem [shape: f32[2,1,4,1], index: 1, kind: output, shape index: {}]
  %s2 = sld [smem:[#allocation0]]
  $region49: #{tpu_custom_call.1} parent=0
    _
  %s4 = ssub.s32 1, %s2
  %s5 = scalar_select 0, %s4, %s2
  $region1: #{tpu_custom_call.1} parent=0
    #allocation3 [shape = 'u8[8192]{0}', space=vmem, size = 0x2000, scoped, tag = 'input window, operand 0']
    #allocation4 [shape = 's32[2]{0}', space=sflag, size = 0x8, scoped, tag = 'scoped memory for tpu_custom_call.1']
    %6 = vsyncpa [#allocation4], 0
    %s7 = scalar_lea.sflag [#allocation4], 1
    %8 = vsyncpa %s7, 0
    loop: start=0, step=1, limit=4
    $region2: #{tpu_custom_call.1} parent=1 // loop_pre_header
      _
    $region3: #{tpu_custom_call.1} parent=1 // loop_header
      %s10 = sphi 0, %s14
      %p11 = scmp.ge.s32.totalorder %s10, 4
      %s17 = sphi 0, %s36
      %s18 = sphi 0, %s32
      %s19 = sphi 0, %s28
      %s20 = sphi 0, %s17
      %s21 = sphi 0, %s18
      %s22 = sphi 0, %s19
      %s23 = sphi 0, %s20
      %s24 = sphi 0, %s21
      %s25 = sphi 0, %s22
      %s43 = sphi 0, %s45
      %s46 = sphi 0, %s43
      %s47 = sphi 0, %s46
      %s63 = sphi 0, %s47
      %s71 = sphi 0, %s73
      %s74 = sphi 0, %s71
      %s75 = sphi 0, %s74
      %s91 = sphi 0, %s75
    $region4: #{tpu_custom_call.1} parent=1 // loop_header_branch
      %13 = sbr.rel (%p11) target = $region8
    $region5: #{tpu_custom_call.1} parent=1 // loop_body
      %s15 = ssub.s32 %s10, 1
      %s16 = ssub.s32 %s10, 2
      %s26 = sadd.s32 1, %s19
      %p27 = scmp.ge.s32.totalorder %s26, 1
      %s28 = scalar_select %p27, 0, %s26
      %s29 = sadd.s32 1, %s18
      %s30 = scalar_select %p27, %s29, %s18
      %p31 = scmp.ge.s32.totalorder %s30, 1
      %s32 = scalar_select %p31, 0, %s30
      %s33 = sadd.s32 1, %s17
      %s34 = scalar_select %p31, %s33, %s17
      %p35 = scmp.ge.s32.totalorder %s34, 2
      %s36 = scalar_select %p35, 0, %s34
      %s37 = sadd.s32 %s18, %s19
      %s38 = sadd.s32 %s32, %s28
      %s39 = ssub.s32 %s17, %s36
      %s40 = ssub.s32 %s37, %s38
      %s41 = sor.u32 %s39, %s40
      %p42 = scmp.eq.s32.totalorder %s41, 0
      %s44 = sadd.s32 %s43, 1
      %s45 = scalar_select %p42, %s43, %s44
      %p48 = pneg %p42
      %p49 = scmp.eq.s32.totalorder %s10, 1
      %p50 = por %p48, %p49
      %p51 = scmp.ne.s32.totalorder %s43, %s46
      %p52 = scmp.eq.s32.totalorder %s10, 0
      %p53 = por %p51, %p52
      %p54 = scmp.ne.s32.totalorder %s43, %s46
      %p55 = scmp.eq.s32.totalorder %s15, 1
      %p56 = por %p54, %p55
      %p57 = scmp.ne.s32.totalorder %s46, %s47
      %p58 = scmp.eq.s32.totalorder %s15, 0
      %p59 = por %p57, %p58
      %p60 = scmp.ne.s32.totalorder %s46, %s47
      %p61 = scmp.eq.s32.totalorder %s16, 1
      %p62 = por %p60, %p61
      %p64 = scmp.ne.s32.totalorder %s47, %s63
      %p65 = scmp.eq.s32.totalorder %s16, 0
      %p66 = por %p64, %p65
      %s67 = ssub.s32 %s17, %s36
      %s68 = ssub.s32 %s18, %s32
      %s69 = sor.u32 %s67, %s68
      %p70 = scmp.eq.s32.totalorder %s69, 0
      %s72 = sadd.s32 %s71, 1
      %s73 = scalar_select %p70, %s71, %s72
      %p76 = pneg %p70
      %p77 = scmp.eq.s32.totalorder %s10, 1
      %p78 = por %p76, %p77
      %p79 = scmp.ne.s32.totalorder %s71, %s74
      %p80 = scmp.eq.s32.totalorder %s10, 0
      %p81 = por %p79, %p80
      %p82 = scmp.ne.s32.totalorder %s71, %s74
      %p83 = scmp.eq.s32.totalorder %s15, 1
      %p84 = por %p82, %p83
      %p85 = scmp.ne.s32.totalorder %s74, %s75
      %p86 = scmp.eq.s32.totalorder %s15, 0
      %p87 = por %p85, %p86
      %p88 = scmp.ne.s32.totalorder %s74, %s75
      %p89 = scmp.eq.s32.totalorder %s16, 1
      %p90 = por %p88, %p89
      %p92 = scmp.ne.s32.totalorder %s75, %s91
      %p93 = scmp.eq.s32.totalorder %s16, 0
      %p94 = por %p92, %p93
      %p95 = scmp.le.s32.totalorder 1, %s10
      %p96 = scmp.lt.s32.totalorder %s10, 3
      %p97 = pnand %p95, %p96
      %p98 = pneg %p97
      // Predicated region
      $region9: #{tpu_custom_call.1} parent=5 // pred_check
        _
      $region10: #{tpu_custom_call.1} parent=5 // pred_check_branch
        %100 = sbr.rel (%p97) target = $region12
      $region11: #{tpu_custom_call.1} parent=5 // pred_region
        %s101 = ssub.s32 %s10, 1
      $region12: #{tpu_custom_call.1} parent=5 // pred_fallthru
        _
      %p102 = scmp.lt.s32.totalorder %s10, 2
      // Predicated region
      $region13: #{tpu_custom_call.1} parent=5 // pred_check
        %p103 = pneg %p102
      $region14: #{tpu_custom_call.1} parent=5 // pred_check_branch
        %105 = sbr.rel (%p103) target = $region16
      $region15: #{tpu_custom_call.1} parent=5 // pred_region
        // Predicated region
        $region17: #{tpu_custom_call.1} parent=15 // pred_check
          %p106 = pneg %p53
        $region18: #{tpu_custom_call.1} parent=15 // pred_check_branch
          %108 = sbr.rel (%p106) target = $region20
        $region19: #{tpu_custom_call.1} parent=15 // pred_region
          %s109 = sand.u32 %s43, 1
          %s110 = scalar_lea.sflag [#allocation4], %s109
          %s111 = sand.u32 %s43, 1
          %s112 = smul.addr %s111, 8
          %s113 = scalar_lea.vmem [#allocation3], %s112
          %s114 = sadd.s32 %s18, %s19
          %s115 = smul.u32 2, %s114
          %117 = vsyncadd %s110, 0
          %s118 = smul.addr %s17, 2
          %s119 = sadd.s32 %s115, %s118
          %s120 = smul.addr %s119, 4
          %s121 = scalar_lea.hbm %s0, %s120
          %s123 = sshll.u32 %s121, 4
          %s124 = int_to_ptr.hbm [resolvable:$true] %s123
          %s125 = sshll.u32 %s113, 4
          %s126 = int_to_ptr.vmem [resolvable:$true] %s125
          %128 = dma.hbm_to_vmem [thread:$0]  %s124, 128, %s126, %s110
        $region20: #{tpu_custom_call.1} parent=15 // pred_fallthru
          _
      $region16: #{tpu_custom_call.1} parent=5 // pred_fallthru
        _
      %p129 = scmp.le.s32.totalorder 1, %s10
      %p130 = scmp.lt.s32.totalorder %s10, 3
      %p131 = pnand %p129, %p130
      %p132 = pneg %p131
      // Predicated region
      $region21: #{tpu_custom_call.1} parent=5 // pred_check
        _
      $region22: #{tpu_custom_call.1} parent=5 // pred_check_branch
        %134 = sbr.rel (%p131) target = $region24
      $region23: #{tpu_custom_call.1} parent=5 // pred_region
        %s135 = ssub.s32 %s10, 1
        %s136 = sand.u32 %s46, 1
        %s137 = scalar_lea.sflag [#allocation4], %s136
        %s138 = sand.u32 %s46, 1
        %s139 = smul.addr %s138, 8
        %s140 = scalar_lea.vmem [#allocation3], %s139
        // Predicated region
        $region25: #{tpu_custom_call.1} parent=23 // pred_check
          %p141 = pneg %p59
        $region26: #{tpu_custom_call.1} parent=23 // pred_check_branch
          %143 = sbr.rel (%p141) target = $region28
        $region27: #{tpu_custom_call.1} parent=23 // pred_region
          %145 = dma.done %s137, 128
        $region28: #{tpu_custom_call.1} parent=23 // pred_fallthru
          _
        %s146 = sand.u32 %s46, 1
        %s147 = scalar_lea.sflag [#allocation4], %s146
        %s148 = sand.u32 %s46, 1
        %s149 = smul.addr %s148, 8
        %s150 = scalar_lea.vmem [#allocation3], %s149
        %p151 = pneg %p59
        %p152 = pneg %p56
        %p153 = pneg %p87
        %p154 = pneg %p84
        %p155 = scmp.lt.s32.totalorder %s20, 1
        %s156 = scalar_select %p155, %s20, 1
        %p157 = scmp.lt.s32.totalorder %s21, 0
        %s158 = scalar_select %p157, %s21, 0
        %s159 = sadd.s32 %s158, %s156
        %s160 = smul.addr %s159, 4
        %s161 = scalar_lea.vmem %s1, %s160
        %s162 = sadd.s32 %s21, %s22
        %s163 = smul.u32 2, %s162
        %p164 = scmp.lt.s32.totalorder %s20, 1
        %s165 = scalar_select %p164, %s20, 1
        %p166 = scmp.lt.s32.totalorder %s21, 0
        %s167 = scalar_select %p166, %s21, 0
        %s168 = sadd.s32 %s167, %s165
        %s169 = smul.addr %s168, 4
        %s170 = scalar_lea.vmem %s1, %s169
        %p171 = scmp.eq.s32.totalorder %s22, 0
        // Predicated region
        $region29: #{tpu_custom_call.1} parent=23 // pred_check
          %p172 = pneg %p171
        $region30: #{tpu_custom_call.1} parent=23 // pred_check_branch
          %174 = sbr.rel (%p172) target = $region32
        $region31: #{tpu_custom_call.1} parent=23 // pred_region
          %175 = vst [vmem:[#allocation2] sm:$0xf] 0.0
        $region32: #{tpu_custom_call.1} parent=23 // pred_fallthru
          _
        %v176 = vld [vmem:[%s140] sm:$0xff]
        %v178 = vrot.slane %v176, 4
        %v180 = vadd.f32 %v176, %v178
        %v181 = vld [vmem:[#allocation2] sm:$0xf]
        %v182 = vadd.f32 %v181, %v180
        %183 = vst [vmem:[#allocation2] sm:$0xf] %v182
        // Predicated region
        $region33: #{tpu_custom_call.1} parent=23 // pred_check
          %p184 = pneg %p171
        $region34: #{tpu_custom_call.1} parent=23 // pred_check_branch
          %186 = sbr.rel (%p184) target = $region36
        $region35: #{tpu_custom_call.1} parent=23 // pred_region
          %v187 = vld [vmem:[#allocation2] sm:$0xf]
          %vm188 = vcmask 1043456
          %v189 = vsel %vm188, %v187, 0.0
          %190 = vadd.xlane.f32.xlu0 %v189
          %v191 = vpop.xlane.xlu0 %190
          %vm192 = vcmask 3072
          %193 = vst.msk [vmem:[%s170] sm:$0xf] %vm192, %v191
        $region36: #{tpu_custom_call.1} parent=23 // pred_fallthru
          _
        %p194 = scmp.lt.s32.totalorder %s20, 1
        %s195 = scalar_select %p194, %s20, 1
        %p196 = scmp.lt.s32.totalorder %s21, 0
        %s197 = scalar_select %p196, %s21, 0
        %s198 = sadd.s32 %s197, %s195
        %s199 = smul.addr %s198, 4
        %s200 = scalar_lea.vmem %s1, %s199
        // Predicated region
        $region37: #{tpu_custom_call.1} parent=23 // pred_check
          %p201 = pneg %p84
        $region38: #{tpu_custom_call.1} parent=23 // pred_check_branch
          %203 = sbr.rel (%p201) target = $region40
        $region39: #{tpu_custom_call.1} parent=23 // pred_region
          _
        $region40: #{tpu_custom_call.1} parent=23 // pred_fallthru
          _
      $region24: #{tpu_custom_call.1} parent=5 // pred_fallthru
        _
      %p204 = scmp.le.s32.totalorder 2, %s10
      // Predicated region
      $region41: #{tpu_custom_call.1} parent=5 // pred_check
        %p205 = pneg %p204
      $region42: #{tpu_custom_call.1} parent=5 // pred_check_branch
        %207 = sbr.rel (%p205) target = $region44
      $region43: #{tpu_custom_call.1} parent=5 // pred_region
        %s208 = ssub.s32 %s10, 2
        // Predicated region
        $region45: #{tpu_custom_call.1} parent=43 // pred_check
          %p209 = pneg %p90
        $region46: #{tpu_custom_call.1} parent=43 // pred_check_branch
          %211 = sbr.rel (%p209) target = $region48
        $region47: #{tpu_custom_call.1} parent=43 // pred_region
          %p212 = scmp.lt.s32.totalorder %s23, 1
          %s213 = scalar_select %p212, %s23, 1
          %p214 = scmp.lt.s32.totalorder %s24, 0
          %s215 = scalar_select %p214, %s24, 0
          %s216 = sadd.s32 %s215, %s213
          %s217 = smul.addr %s216, 4
          %s218 = scalar_lea.vmem %s1, %s217
        $region48: #{tpu_custom_call.1} parent=43 // pred_fallthru
          _
      $region44: #{tpu_custom_call.1} parent=5 // pred_fallthru
        _
    $region6: #{tpu_custom_call.1} parent=1 // loop_footer
      %s14 = sadd.s32 1, %s10
    $region7: #{tpu_custom_call.1} parent=1 // loop_footer_branch
      %9 = sbr.rel target = $region3
    $region8: #{tpu_custom_call.1} parent=1 // loop_exit
      _
    %219 = vsyncpa [#allocation4], 1
    %s220 = scalar_lea.sflag [#allocation4], 1
    %221 = vsyncpa %s220, 1

</llo_original>
